<compile_context>
chip_gen: v6e
topology: v6e:2x2x1
jax: 0.10.0
libtpu: 0.0.40
codegen_flags: <defaults>
</compile_context>

<pallas_src>
import functools

import jax
import jax.numpy as jnp
from jax.experimental import pallas as pl
from jax.experimental.pallas import tpu as pltpu

# Leave headroom below v7x's 64 MiB physical VMEM; well under v5e/v6e 128 MiB.
VMEM_LIMIT_BYTES = 48 * 1024 * 1024


def _round_up(x, m):
    return (x + m - 1) // m * m


# ----------------------------- Pallas kernels -----------------------------

def matmul_bias_kernel(x_ref, w_ref, b_ref, o_ref):
    """o = x @ w + b.  x:(tm,K) bf16, w:(K,Mp) bf16, b:(1,Mp) f32, o:(tm,Mp) f32."""
    o_ref[...] = (jnp.dot(x_ref[...], w_ref[...],
                          preferred_element_type=jnp.float32) + b_ref[...])


def _im2col_taps(x_ref, width, m):
    """Build the transposed im2col operand (9*Cin, m).

    x_ref: (1, Cin, Rpad) bf16 -- zero-padded image, flattened spatial on lanes.
    Tap t=(dy,dx) is the contiguous lane window x[:, dy*(width+2)+dx : ...+m];
    no strided 2-D slices / reshapes, one big MXU-friendly operand.
    """
    x = x_ref[...]
    taps = []
    for t in range(9):
        dy, dx = divmod(t, 3)
        s = dy * (width + 2) + dx
        taps.append(x[0, :, s:s + m])
    return jnp.concatenate(taps, axis=0)           # (9*Cin, m)


def conv3x3_kernel(x_ref, w_ref, b_ref, o_ref, *, width, m):
    """3x3 'same' conv (cross-correlation, like nn.Conv2d), channel-major.

    x_ref: (1, Cin, Rpad) bf16   w_ref: (Cout, 9*Cin) bf16
    b_ref: (Cout, 1) f32         o_ref: (1, Cout, m) f32, m = H*(W+2)
    (the W..W+1 "junk" columns per row are sliced off by the wrapper)
    """
    patches = _im2col_taps(x_ref, width, m)                       # (9Cin, m)
    acc = jnp.dot(w_ref[...], patches,
                  preferred_element_type=jnp.float32)             # (Cout, m)
    o_ref[...] = (acc + b_ref[...]).reshape(o_ref.shape)


def conv3x3_argmax_kernel(x_ref, w_ref, b_ref, o_ref, *, width, m):
    """Fused 3x3 conv (dim -> num_cls) + channel argmax.

    Logits never leave VMEM; argmax is an unrolled compare/select over
    lane-wide class rows (first maximal index, matching torch.max).
    o_ref: (1, 1, m) int32.
    """
    patches = _im2col_taps(x_ref, width, m)                       # (9Cin, m)
    logits = (jnp.dot(w_ref[...], patches,
                      preferred_element_type=jnp.float32) + b_ref[...])
    num_cls = logits.shape[0]
    best_val = logits[0:1, :]
    best_idx = jnp.zeros((1, m), jnp.int32)
    for c in range(1, num_cls):                                   # unrolled
        v = logits[c:c + 1, :]
        take = v > best_val                  # strict ">" keeps first maximum
        best_val = jnp.where(take, v, best_val)
        best_idx = jnp.where(take, jnp.int32(c), best_idx)
    o_ref[...] = best_idx.reshape(o_ref.shape)


# ------------------------------ JAX wrappers -------------------------------

def upsample_nearest_nchw(x, out_h, out_w):
    """nn.Upsample(mode='nearest'): src = floor(dst * in / out)."""
    # TODO(synk): fold this gather (and the conv zero-pad) into the conv
    # BlockSpec via PrefetchScalarGridSpec index tables to drop the remaining
    # XLA gather/pad HBM round-trips.
    in_h, in_w = x.shape[2], x.shape[3]
    rows = (jnp.arange(out_h) * in_h) // out_h
    cols = (jnp.arange(out_w) * in_w) // out_w
    return x[:, :, rows[:, None], cols[None, :]]


def _conv_prep(x_nchw, w_oihw, bias):
    """Pad + flatten NCHW input (channel-major, spatial on lanes), cast bf16,
    pack weights as (Cout, 9*Cin) tap-major and bias as (Cout, 1) f32."""
    bs, cin, h, w = x_nchw.shape
    cout = w_oihw.shape[0]
    m = h * (w + 2)                      # flat output rows (incl. junk cols)
    r = (h + 2) * (w + 2)                # flat padded-image rows
    rpad = _round_up(m + 2 * w + 6, 128)  # max tap read + lane alignment
    xp = jnp.pad(x_nchw.astype(jnp.bfloat16),
                 ((0, 0), (0, 0), (1, 1), (1, 1)))
    xf = jnp.pad(xp.reshape(bs, cin, r), ((0, 0), (0, 0), (0, rpad - r)))
    wk = jnp.transpose(w_oihw, (0, 2, 3, 1)).reshape(cout, 9 * cin)
    wk = wk.astype(jnp.bfloat16)
    bk = bias.reshape(cout, 1).astype(jnp.float32)
    return xf, wk, bk, (bs, cin, cout, h, w, m, rpad)


def conv3x3_same(x_nchw, w_oihw, bias):
    """nn.Conv2d(Cin, Cout, (3,3), padding=(1,1)), NCHW in / NCHW f32 out."""
    xf, wk, bk, (bs, cin, cout, h, w, m, rpad) = _conv_prep(x_nchw, w_oihw, bias)
    # TODO(synk): for the real embed=768 config, add a row-tile grid axis with
    # a 1-row halo so each block (x2 buffering) stays under v7x's 64 MiB VMEM.
    kern = functools.partial(conv3x3_kernel, width=w, m=m)
    out = pl.pallas_call(
        kern,
        out_shape=jax.ShapeDtypeStruct((bs, cout, m), jnp.float32),
        grid=(bs,),
        in_specs=[
            pl.BlockSpec((1, cin, rpad), lambda i: (i, 0, 0)),
            pl.BlockSpec((cout, 9 * cin), lambda i: (0, 0)),
            pl.BlockSpec((cout, 1), lambda i: (0, 0)),
        ],
        out_specs=pl.BlockSpec((1, cout, m), lambda i: (i, 0, 0)),
        compiler_params=pltpu.CompilerParams(
            dimension_semantics=("parallel",),
            vmem_limit_bytes=VMEM_LIMIT_BYTES),
    )(xf, wk, bk)
    return out.reshape(bs, cout, h, w + 2)[:, :, :, :w]


def conv3x3_argmax(x_nchw, w_oihw, bias):
    """Fused Conv2d(dim, num_cls, 3, pad=1) + torch.max(., 1).indices."""
    xf, wk, bk, (bs, cin, cout, h, w, m, rpad) = _conv_prep(x_nchw, w_oihw, bias)
    kern = functools.partial(conv3x3_argmax_kernel, width=w, m=m)
    out = pl.pallas_call(
        kern,
        out_shape=jax.ShapeDtypeStruct((bs, 1, m), jnp.int32),
        grid=(bs,),
        in_specs=[
            pl.BlockSpec((1, cin, rpad), lambda i: (i, 0, 0)),
            pl.BlockSpec((cout, 9 * cin), lambda i: (0, 0)),
            pl.BlockSpec((cout, 1), lambda i: (0, 0)),
        ],
        out_specs=pl.BlockSpec((1, 1, m), lambda i: (i, 0, 0)),
        compiler_params=pltpu.CompilerParams(
            dimension_semantics=("parallel",),
            vmem_limit_bytes=VMEM_LIMIT_BYTES),
    )(xf, wk, bk)
    return out.reshape(bs, h, w + 2)[:, :, :w]


def patch_embed_backbone(x_nchw, w_pe, b_pe, patch):
    """Deterministic surrogate for backbone.extract_features.

    TODO(synk): full SAM2 ViT trunk not implemented; only the patch-embedding
    projection is done (gridded bf16 Pallas matmul).  Output matches the shape
    the torch forward feeds to segmentation_conv: (bs, embed, H/patch, W/patch).
    """
    bs, c, h, w = x_nchw.shape
    hp, wp = h // patch, w // patch
    n = bs * hp * wp
    k = c * patch * patch
    embed = w_pe.shape[1]
    p = x_nchw.reshape(bs, c, hp, patch, wp, patch)
    p = jnp.transpose(p, (0, 2, 4, 1, 3, 5)).reshape(n, k).astype(jnp.bfloat16)

    m_pad = _round_up(embed, 128)              # lane-dense output stores
    tm = min(256, _round_up(n, 8))             # row tile (multiple of 8)
    n_pad = _round_up(n, tm)
    p = jnp.pad(p, ((0, n_pad - n), (0, 0)))
    wk = jnp.pad(w_pe.astype(jnp.bfloat16), ((0, 0), (0, m_pad - embed)))
    bk = jnp.pad(b_pe.astype(jnp.float32).reshape(1, embed),
                 ((0, 0), (0, m_pad - embed)))

    feats = pl.pallas_call(
        matmul_bias_kernel,
        out_shape=jax.ShapeDtypeStruct((n_pad, m_pad), jnp.float32),
        grid=(n_pad // tm,),
        in_specs=[
            pl.BlockSpec((tm, k), lambda i: (i, 0)),
            pl.BlockSpec((k, m_pad), lambda i: (0, 0)),
            pl.BlockSpec((1, m_pad), lambda i: (0, 0)),
        ],
        out_specs=pl.BlockSpec((tm, m_pad), lambda i: (i, 0)),
        compiler_params=pltpu.CompilerParams(
            dimension_semantics=("parallel",),
            vmem_limit_bytes=VMEM_LIMIT_BYTES),
    )(p, wk, bk)
    feats = feats[:n, :embed].reshape(bs, hp, wp, embed)
    return jnp.transpose(feats, (0, 3, 1, 2))     # (bs, embed, hp, wp)


def init_params(key, *, in_ch=3, embed=32, patch=14, dim=16, num_cls=4):
    ks = jax.random.split(key, 6)
    k_in = in_ch * patch * patch
    return {
        "w_pe": jax.random.normal(ks[0], (k_in, embed), jnp.float32)
                / jnp.sqrt(jnp.float32(k_in)),
        "b_pe": jax.random.normal(ks[1], (embed,), jnp.float32) * 0.01,
        # conv weights stored OIHW like torch: (Cout, Cin, 3, 3)
        "w1": jax.random.normal(ks[2], (dim, embed, 3, 3), jnp.float32)
              / jnp.sqrt(jnp.float32(9 * embed)),
        "b1": jax.random.normal(ks[3], (dim,), jnp.float32) * 0.01,
        "w2": jax.random.normal(ks[4], (num_cls, dim, 3, 3), jnp.float32)
              / jnp.sqrt(jnp.float32(9 * dim)),
        "b2": jax.random.normal(ks[5], (num_cls,), jnp.float32) * 0.01,
    }


def sam2seg_forward(x, params, *, img_h, img_w, edge=10, patch=14,
                    mode="mapping"):
    # self.upsample -> ((img_h - 2e)//14*14, (img_w - 2e)//14*14)
    h = (img_h - 2 * edge) // patch * patch
    w = (img_w - 2 * edge) // patch * patch
    x = upsample_nearest_nchw(x, h, w)
    # backbone features -> (bs, embed, h/patch, w/patch)
    out = patch_embed_backbone(x, params["w_pe"], params["b_pe"], patch)
    # segmentation_conv[0:3]
    out = upsample_nearest_nchw(out, out.shape[2] * 4, out.shape[3] * 4)
    out = conv3x3_same(out, params["w1"], params["b1"])
    out = upsample_nearest_nchw(out, img_h - 2 * edge, img_w - 2 * edge)
    if mode == "mapping":
        return out
    # segmentation_conv[3] + torch.max(., 1).indices.squeeze()  (fused kernel)
    idx = conv3x3_argmax(out, params["w2"], params["b2"])
    return jnp.squeeze(idx)        # mirrors torch .squeeze()


# ----------------------------------- main -----------------------------------

if __name__ == "__main__":
    # Small-but-consistent config (real sam2_b: embedding_size=768; we use 32).
    IMG_H = IMG_W = 48
    EDGE, DIM, NUM_CLS, PATCH, EMBED = 10, 16, 4, 14, 32

    key = jax.random.PRNGKey(0)
    kp, kx = jax.random.split(key)
    params = init_params(kp, in_ch=3, embed=EMBED, patch=PATCH, dim=DIM,
                         num_cls=NUM_CLS)
    x = jax.random.normal(kx, (2, 3, IMG_H, IMG_W), jnp.float32)

    fwd_map = jax.jit(functools.partial(
        sam2seg_forward, img_h=IMG_H, img_w=IMG_W, edge=EDGE, patch=PATCH,
        mode="mapping"))
    fwd_idx = jax.jit(functools.partial(
        sam2seg_forward, img_h=IMG_H, img_w=IMG_W, edge=EDGE, patch=PATCH,
        mode="argmax"))

    out_map = fwd_map(x, params)
    out_idx = fwd_idx(x, params)
    jax.block_until_ready((out_map, out_idx))

    assert out_map.shape == (2, DIM, IMG_H - 2 * EDGE, IMG_W - 2 * EDGE), out_map.shape
    assert out_map.dtype == jnp.float32
    assert out_idx.shape == (2, IMG_H - 2 * EDGE, IMG_W - 2 * EDGE), out_idx.shape
    assert out_idx.dtype == jnp.int32

    # Consistency check 1: Pallas im2col conv vs XLA conv (both bf16 operands,
    # f32 accumulation).
    xc = jax.random.normal(jax.random.PRNGKey(1), (2, EMBED, 8, 8), jnp.float32)
    got = conv3x3_same(xc, params["w1"], params["b1"])
    ref = jax.lax.conv_general_dilated(
        xc.astype(jnp.bfloat16), params["w1"].astype(jnp.bfloat16),
        window_strides=(1, 1), padding="SAME",
        dimension_numbers=("NCHW", "OIHW", "NCHW"),
        preferred_element_type=jnp.float32,
    ) + params["b1"][None, :, None, None]
    err = float(jnp.max(jnp.abs(got - ref)))
    assert jnp.allclose(got, ref, atol=2e-2, rtol=2e-2), err

    # Consistency check 2: fused conv+argmax vs XLA conv + argmax.
    logits_ref = jax.lax.conv_general_dilated(
        out_map.astype(jnp.bfloat16), params["w2"].astype(jnp.bfloat16),
        window_strides=(1, 1), padding="SAME",
        dimension_numbers=("NCHW", "OIHW", "NCHW"),
        preferred_element_type=jnp.float32,
    ) + params["b2"][None, :, None, None]
    idx_ref = jnp.argmax(logits_ref, axis=1)
    match = float(jnp.mean((out_idx == idx_ref).astype(jnp.float32)))
    assert match > 0.98, match    # tolerance for near-exact ties only

    print("KERNEL_OK")
</pallas_src>

<mosaic_0001>
module attributes {stable_mosaic.version = 11 : i64} {
  func.func @matmul_bias_kernel(%arg0: i32, %arg1: memref<8x588xbf16, #tpu.memory_space<vmem>>, %arg2: memref<588x128xbf16, #tpu.memory_space<vmem>>, %arg3: memref<1x128xf32, #tpu.memory_space<vmem>>, %arg4: memref<8x128xf32, #tpu.memory_space<vmem>>) attributes {dimension_semantics = [#tpu.dimension_semantics<parallel>], iteration_bounds = array<i64: 1>, scalar_prefetch = 0 : i64, scratch_operands = 0 : i64, tpu.core_type = #tpu.core_type<tc>, window_params = [{transform_indices = @transform_0, window_bounds = array<i64: 8, 588>}, {pipeline_mode = #tpu.pipeline_mode<synchronous>, transform_indices = @transform_1, window_bounds = array<i64: 588, 128>}, {pipeline_mode = #tpu.pipeline_mode<synchronous>, transform_indices = @transform_2, window_bounds = array<i64: 1, 128>}, {transform_indices = @transform_3, window_bounds = array<i64: 8, 128>}]} {
    %c0 = arith.constant 0 : index
    %c0_0 = arith.constant 0 : index
    %0 = vector.load %arg1[%c0, %c0_0] : memref<8x588xbf16, #tpu.memory_space<vmem>>, vector<8x588xbf16>
    %c0_1 = arith.constant 0 : index
    %c0_2 = arith.constant 0 : index
    %1 = vector.load %arg2[%c0_1, %c0_2] : memref<588x128xbf16, #tpu.memory_space<vmem>>, vector<588x128xbf16>
    %cst = arith.constant dense<0.000000e+00> : vector<8x128xf32>
    %2 = tpu.matmul %0, %1, %cst {dimension_numbers = #tpu.dot_dimension_numbers<[1], [0], [0], [1], [0, 0, 1, 1], [], []>} : vector<8x588xbf16>, vector<588x128xbf16>, vector<8x128xf32> -> vector<8x128xf32>
    %c0_3 = arith.constant 0 : index
    %c0_4 = arith.constant 0 : index
    %3 = vector.load %arg3[%c0_3, %c0_4] : memref<1x128xf32, #tpu.memory_space<vmem>>, vector<1x128xf32>
    %4 = vector.broadcast %3 : vector<1x128xf32> to vector<8x128xf32>
    %5 = arith.addf %2, %4 : vector<8x128xf32>
    %c0_5 = arith.constant 0 : index
    %c0_6 = arith.constant 0 : index
    %6 = vector.load %arg4[%c0_5, %c0_6] : memref<8x128xf32, #tpu.memory_space<vmem>>, vector<8x128xf32>
    tpu.vector_store %arg4[%c0_5, %c0_6], %5 {strides = array<i32>} : memref<8x128xf32, #tpu.memory_space<vmem>>, vector<8x128xf32>,
    return
  }
  func.func @transform_0(%arg0: i32) -> (i32, i32) {
    %c0_i32 = arith.constant 0 : i32
    %c0_i32_0 = arith.constant 0 : i32
    return %arg0, %c0_i32 : i32, i32
  }
  func.func @transform_1(%arg0: i32) -> (i32, i32) {
    %c0_i32 = arith.constant 0 : i32
    %c0_i32_0 = arith.constant 0 : i32
    %c0_i32_1 = arith.constant 0 : i32
    return %c0_i32, %c0_i32_0 : i32, i32
  }
  func.func @transform_2(%arg0: i32) -> (i32, i32) {
    %c0_i32 = arith.constant 0 : i32
    %c0_i32_0 = arith.constant 0 : i32
    %c0_i32_1 = arith.constant 0 : i32
    return %c0_i32, %c0_i32_0 : i32, i32
  }
  func.func @transform_3(%arg0: i32) -> (i32, i32) {
    %c0_i32 = arith.constant 0 : i32
    %c0_i32_0 = arith.constant 0 : i32
    return %arg0, %c0_i32 : i32, i32
  }
}

module attributes {stable_mosaic.version = 11 : i64} {
  func.func @conv3x3_kernel(%arg0: i32, %arg1: memref<1x32x128xbf16, #tpu.memory_space<vmem>>, %arg2: memref<16x288xbf16, #tpu.memory_space<vmem>>, %arg3: memref<16x1xf32, #tpu.memory_space<vmem>>, %arg4: memref<1x16x80xf32, #tpu.memory_space<vmem>>) attributes {dimension_semantics = [#tpu.dimension_semantics<parallel>], iteration_bounds = array<i64: 2>, scalar_prefetch = 0 : i64, scratch_operands = 0 : i64, tpu.core_type = #tpu.core_type<tc>, window_params = [{transform_indices = @transform_0, window_bounds = array<i64: 1, 32, 128>}, {pipeline_mode = #tpu.pipeline_mode<synchronous>, transform_indices = @transform_1, window_bounds = array<i64: 16, 288>}, {pipeline_mode = #tpu.pipeline_mode<synchronous>, transform_indices = @transform_2, window_bounds = array<i64: 16, 1>}, {transform_indices = @transform_3, window_bounds = array<i64: 1, 16, 80>}]} {
    %c0 = arith.constant 0 : index
    %c0_0 = arith.constant 0 : index
    %c0_1 = arith.constant 0 : index
    %0 = vector.load %arg1[%c0, %c0_0, %c0_1] : memref<1x32x128xbf16, #tpu.memory_space<vmem>>, vector<1x32x128xbf16>
    %1 = vector.extract_strided_slice %0 {offsets = [0, 0, 0], sizes = [1, 32, 80], strides = [1, 1, 1]} : vector<1x32x128xbf16> to vector<1x32x80xbf16>
    %2 = vector.shape_cast %1 : vector<1x32x80xbf16> to vector<32x80xbf16>
    %3 = vector.extract_strided_slice %0 {offsets = [0, 0, 1], sizes = [1, 32, 80], strides = [1, 1, 1]} : vector<1x32x128xbf16> to vector<1x32x80xbf16>
    %4 = vector.shape_cast %3 : vector<1x32x80xbf16> to vector<32x80xbf16>
    %5 = vector.extract_strided_slice %0 {offsets = [0, 0, 2], sizes = [1, 32, 80], strides = [1, 1, 1]} : vector<1x32x128xbf16> to vector<1x32x80xbf16>
    %6 = vector.shape_cast %5 : vector<1x32x80xbf16> to vector<32x80xbf16>
    %7 = vector.extract_strided_slice %0 {offsets = [0, 0, 10], sizes = [1, 32, 80], strides = [1, 1, 1]} : vector<1x32x128xbf16> to vector<1x32x80xbf16>
    %8 = vector.shape_cast %7 : vector<1x32x80xbf16> to vector<32x80xbf16>
    %9 = vector.extract_strided_slice %0 {offsets = [0, 0, 11], sizes = [1, 32, 80], strides = [1, 1, 1]} : vector<1x32x128xbf16> to vector<1x32x80xbf16>
    %10 = vector.shape_cast %9 : vector<1x32x80xbf16> to vector<32x80xbf16>
    %11 = vector.extract_strided_slice %0 {offsets = [0, 0, 12], sizes = [1, 32, 80], strides = [1, 1, 1]} : vector<1x32x128xbf16> to vector<1x32x80xbf16>
    %12 = vector.shape_cast %11 : vector<1x32x80xbf16> to vector<32x80xbf16>
    %13 = vector.extract_strided_slice %0 {offsets = [0, 0, 20], sizes = [1, 32, 80], strides = [1, 1, 1]} : vector<1x32x128xbf16> to vector<1x32x80xbf16>
    %14 = vector.shape_cast %13 : vector<1x32x80xbf16> to vector<32x80xbf16>
    %15 = vector.extract_strided_slice %0 {offsets = [0, 0, 21], sizes = [1, 32, 80], strides = [1, 1, 1]} : vector<1x32x128xbf16> to vector<1x32x80xbf16>
    %16 = vector.shape_cast %15 : vector<1x32x80xbf16> to vector<32x80xbf16>
    %17 = vector.extract_strided_slice %0 {offsets = [0, 0, 22], sizes = [1, 32, 80], strides = [1, 1, 1]} : vector<1x32x128xbf16> to vector<1x32x80xbf16>
    %18 = vector.shape_cast %17 : vector<1x32x80xbf16> to vector<32x80xbf16>
    %19 = tpu.concatenate %2, %4, %6, %8, %10, %12, %14, %16, %18 in 0 : vector<32x80xbf16>, vector<32x80xbf16>, vector<32x80xbf16>, vector<32x80xbf16>, vector<32x80xbf16>, vector<32x80xbf16>, vector<32x80xbf16>, vector<32x80xbf16>, vector<32x80xbf16> -> vector<288x80xbf16>
    %c0_2 = arith.constant 0 : index
    %c0_3 = arith.constant 0 : index
    %20 = vector.load %arg2[%c0_2, %c0_3] : memref<16x288xbf16, #tpu.memory_space<vmem>>, vector<16x288xbf16>
    %cst = arith.constant dense<0.000000e+00> : vector<16x80xf32>
    %21 = tpu.matmul %20, %19, %cst {dimension_numbers = #tpu.dot_dimension_numbers<[1], [0], [0], [1], [0, 0, 1, 1], [], []>} : vector<16x288xbf16>, vector<288x80xbf16>, vector<16x80xf32> -> vector<16x80xf32>
    %c0_4 = arith.constant 0 : index
    %c0_5 = arith.constant 0 : index
    %22 = vector.load %arg3[%c0_4, %c0_5] : memref<16x1xf32, #tpu.memory_space<vmem>>, vector<16x1xf32>
    %23 = vector.broadcast %22 : vector<16x1xf32> to vector<16x80xf32>
    %24 = arith.addf %21, %23 : vector<16x80xf32>
    %25 = vector.shape_cast %24 : vector<16x80xf32> to vector<1x16x80xf32>
    %c0_6 = arith.constant 0 : index
    %c0_7 = arith.constant 0 : index
    %c0_8 = arith.constant 0 : index
    %26 = vector.load %arg4[%c0_6, %c0_7, %c0_8] : memref<1x16x80xf32, #tpu.memory_space<vmem>>, vector<1x16x80xf32>
    tpu.vector_store %arg4[%c0_6, %c0_7, %c0_8], %25 {strides = array<i32>} : memref<1x16x80xf32, #tpu.memory_space<vmem>>, vector<1x16x80xf32>,
    return
  }
  func.func @transform_0(%arg0: i32) -> (i32, i32, i32) {
    %c0_i32 = arith.constant 0 : i32
    %c0_i32_0 = arith.constant 0 : i32
    %c0_i32_1 = arith.constant 0 : i32
    return %arg0, %c0_i32, %c0_i32_0 : i32, i32, i32
  }
  func.func @transform_1(%arg0: i32) -> (i32, i32) {
    %c0_i32 = arith.constant 0 : i32
    %c0_i32_0 = arith.constant 0 : i32
    %c0_i32_1 = arith.constant 0 : i32
    return %c0_i32, %c0_i32_0 : i32, i32
  }
  func.func @transform_2(%arg0: i32) -> (i32, i32) {
    %c0_i32 = arith.constant 0 : i32
    %c0_i32_0 = arith.constant 0 : i32
    %c0_i32_1 = arith.constant 0 : i32
    return %c0_i32, %c0_i32_0 : i32, i32
  }
  func.func @transform_3(%arg0: i32) -> (i32, i32, i32) {
    %c0_i32 = arith.constant 0 : i32
    %c0_i32_0 = arith.constant 0 : i32
    %c0_i32_1 = arith.constant 0 : i32
    return %arg0, %c0_i32, %c0_i32_0 : i32, i32, i32
  }
}

</mosaic_0001>

<llo_original>
// kernel: sam2seg_forward.2
$region0: #{sam2seg_forward.2}
  #allocation0 [shape = 'u32[]', space=smem, size = 0x4, offset = 0x4, fixed_abs, tag = 'smem constant byte address 0x4 - core index']
  #allocation1 [shape = 'u32[144,128]{1,0:T(1,128)}', space=vmem, size = 0x12000, scoped, tag = 'internal scratch']
  %s0 = inlined_call_operand.vmem [shape: bf16[8,588], index: 0, kind: input, shape index: {}]
  %s1 = inlined_call_operand.vmem [shape: bf16[588,128], index: 1, kind: input, shape index: {}]
  %s2 = inlined_call_operand.vmem [shape: f32[1,128], index: 2, kind: input, shape index: {}]
  %s3 = inlined_call_operand.vmem [shape: f32[8,128], index: 3, kind: output, shape index: {}]
  %s4 = sld [smem:[#allocation0]]
  $region22: #{sam2seg_forward.2} parent=0
    _
  %s6 = ssub.s32 1, %s4
  %s7 = scalar_select 0, %s6, %s4
  // Predicated region
  $region2: #{sam2seg_forward.2} parent=0 // pred_check
    _
  $region3: #{sam2seg_forward.2} parent=0 // pred_check_branch
    %9 = sbr.rel (0) target = $region5
  $region4: #{sam2seg_forward.2} parent=0 // pred_region
    _
  $region5: #{sam2seg_forward.2} parent=0 // pred_fallthru
    _
  // Predicated region
  $region6: #{sam2seg_forward.2} parent=0 // pred_check
    _
  $region7: #{sam2seg_forward.2} parent=0 // pred_check_branch
    %11 = sbr.rel (0) target = $region9
  $region8: #{sam2seg_forward.2} parent=0 // pred_region
    _
  $region9: #{sam2seg_forward.2} parent=0 // pred_fallthru
    _
  // Predicated region
  $region10: #{sam2seg_forward.2} parent=0 // pred_check
    _
  $region11: #{sam2seg_forward.2} parent=0 // pred_check_branch
    %13 = sbr.rel (0) target = $region13
  $region12: #{sam2seg_forward.2} parent=0 // pred_region
    _
  $region13: #{sam2seg_forward.2} parent=0 // pred_fallthru
    _
  %v15 = vld [vmem:[%s0] sm:$0xff]
  %v16 = vld [vmem:[%s0 + $0x8] sm:$0xff]
  %v17 = vld [vmem:[%s0 + $0x10] sm:$0xf]
  %v18 = vld [vmem:[%s1] sm:$0xf]
  %v19 = vld [vmem:[%s1 + $0x4] sm:$0xf]
  %v20 = vld [vmem:[%s1 + $0x8] sm:$0xf]
  %v21 = vld [vmem:[%s1 + $0xc] sm:$0xf]
  %v22 = vld [vmem:[%s1 + $0x10] sm:$0xf]
  %v23 = vld [vmem:[%s1 + $0x14] sm:$0xf]
  %v24 = vld [vmem:[%s1 + $0x18] sm:$0xf]
  %v25 = vld [vmem:[%s1 + $0x1c] sm:$0xf]
  %v26 = vld [vmem:[%s1 + $0x20] sm:$0xf]
  %v27 = vld [vmem:[%s1 + $0x24] sm:$0xf]
  %v28 = vld [vmem:[%s1 + $0x28] sm:$0xf]
  %v29 = vld [vmem:[%s1 + $0x2c] sm:$0xf]
  %v30 = vld [vmem:[%s1 + $0x30] sm:$0xf]
  %v31 = vld [vmem:[%s1 + $0x34] sm:$0xf]
  %v32 = vld [vmem:[%s1 + $0x38] sm:$0xf]
  %v33 = vld [vmem:[%s1 + $0x3c] sm:$0xf]
  %v34 = vld [vmem:[%s1 + $0x40] sm:$0xf]
  %v35 = vld [vmem:[%s1 + $0x44] sm:$0xf]
  %v36 = vld [vmem:[%s1 + $0x48] sm:$0xf]
  %v37 = vld [vmem:[%s1 + $0x4c] sm:$0xf]
  %v38 = vld [vmem:[%s1 + $0x50] sm:$0xf]
  %v39 = vld [vmem:[%s1 + $0x54] sm:$0xf]
  %v40 = vld [vmem:[%s1 + $0x58] sm:$0xf]
  %v41 = vld [vmem:[%s1 + $0x5c] sm:$0xf]
  %v42 = vld [vmem:[%s1 + $0x60] sm:$0xf]
  %v43 = vld [vmem:[%s1 + $0x64] sm:$0xf]
  %v44 = vld [vmem:[%s1 + $0x68] sm:$0xf]
  %v45 = vld [vmem:[%s1 + $0x6c] sm:$0xf]
  %v46 = vld [vmem:[%s1 + $0x70] sm:$0xf]
  %v47 = vld [vmem:[%s1 + $0x74] sm:$0xf]
  %v48 = vld [vmem:[%s1 + $0x78] sm:$0xf]
  %v49 = vld [vmem:[%s1 + $0x7c] sm:$0xf]
  %v50 = vld [vmem:[%s1 + $0x80] sm:$0xf]
  %v51 = vld [vmem:[%s1 + $0x84] sm:$0xf]
  %v52 = vld [vmem:[%s1 + $0x88] sm:$0xf]
  %v53 = vld [vmem:[%s1 + $0x8c] sm:$0xf]
  %v54 = vld [vmem:[%s1 + $0x90] sm:$0xf]
  %v55 = vld [vmem:[%s1 + $0x94] sm:$0xf]
  %v56 = vld [vmem:[%s1 + $0x98] sm:$0xf]
  %v57 = vld [vmem:[%s1 + $0x9c] sm:$0xf]
  %v58 = vld [vmem:[%s1 + $0xa0] sm:$0xf]
  %v59 = vld [vmem:[%s1 + $0xa4] sm:$0xf]
  %v60 = vld [vmem:[%s1 + $0xa8] sm:$0xf]
  %v61 = vld [vmem:[%s1 + $0xac] sm:$0xf]
  %v62 = vld [vmem:[%s1 + $0xb0] sm:$0xf]
  %v63 = vld [vmem:[%s1 + $0xb4] sm:$0xf]
  %v64 = vld [vmem:[%s1 + $0xb8] sm:$0xf]
  %v65 = vld [vmem:[%s1 + $0xbc] sm:$0xf]
  %v66 = vld [vmem:[%s1 + $0xc0] sm:$0xf]
  %v67 = vld [vmem:[%s1 + $0xc4] sm:$0xf]
  %v68 = vld [vmem:[%s1 + $0xc8] sm:$0xf]
  %v69 = vld [vmem:[%s1 + $0xcc] sm:$0xf]
  %v70 = vld [vmem:[%s1 + $0xd0] sm:$0xf]
  %v71 = vld [vmem:[%s1 + $0xd4] sm:$0xf]
  %v72 = vld [vmem:[%s1 + $0xd8] sm:$0xf]
  %v73 = vld [vmem:[%s1 + $0xdc] sm:$0xf]
  %v74 = vld [vmem:[%s1 + $0xe0] sm:$0xf]
  %v75 = vld [vmem:[%s1 + $0xe4] sm:$0xf]
  %v76 = vld [vmem:[%s1 + $0xe8] sm:$0xf]
  %v77 = vld [vmem:[%s1 + $0xec] sm:$0xf]
  %v78 = vld [vmem:[%s1 + $0xf0] sm:$0xf]
  %v79 = vld [vmem:[%s1 + $0xf4] sm:$0xf]
  %v80 = vld [vmem:[%s1 + $0xf8] sm:$0xf]
  %v81 = vld [vmem:[%s1 + $0xfc] sm:$0xf]
  %v82 = vld [vmem:[%s1 + $0x100] sm:$0xf]
  %v83 = vld [vmem:[%s1 + $0x104] sm:$0xf]
  %v84 = vld [vmem:[%s1 + $0x108] sm:$0xf]
  %v85 = vld [vmem:[%s1 + $0x10c] sm:$0xf]
  %v86 = vld [vmem:[%s1 + $0x110] sm:$0xf]
  %v87 = vld [vmem:[%s1 + $0x114] sm:$0xf]
  %v88 = vld [vmem:[%s1 + $0x118] sm:$0xf]
  %v89 = vld [vmem:[%s1 + $0x11c] sm:$0xf]
  %v90 = vld [vmem:[%s1 + $0x120] sm:$0xf]
  %v91 = vld [vmem:[%s1 + $0x124] sm:$0x3]
  %v92 = vld [vmem:[%s2] sm:$0x1]
  %v94 = vlaneseq
  %v95 = vshrl.u32 %v94, 7
  %v96 = vsub.s32 0, %v95
  %v97 = vrot.slane %v92, %v96
  %v102 = vunpack.c.l.b16 %v15
  %v103 = vunpack.c.h.b16 %v15
  %v104 = vunpack.c.l.b16 %v16
  %v105 = vunpack.c.h.b16 %v16
  %v106 = vunpack.c.l.b16 %v17
  %v107 = vpack.c.b16 %v102, %v102
  %v108 = vpack.c.b16 %v103, %v103
  %v109 = vpack.c.b16 %v104, %v104
  %v110 = vpack.c.b16 %v105, %v105
  %v111 = vpack.c.b16 %v106, %v106
  %v190 = vunpack.c.l.b16 %v18
  %v191 = vunpack.c.l.b16 %v19
  %v192 = vunpack.c.l.b16 %v20
  %v193 = vunpack.c.l.b16 %v21
  %v194 = vunpack.c.l.b16 %v22
  %v195 = vunpack.c.l.b16 %v23
  %v196 = vunpack.c.l.b16 %v24
  %v197 = vunpack.c.l.b16 %v25
  %v198 = vunpack.c.l.b16 %v26
  %v199 = vunpack.c.l.b16 %v27
  %v200 = vunpack.c.l.b16 %v28
  %v201 = vunpack.c.l.b16 %v29
  %v202 = vunpack.c.l.b16 %v30
  %v203 = vunpack.c.l.b16 %v31
  %v204 = vunpack.c.l.b16 %v32
  %v205 = vunpack.c.l.b16 %v33
  %v206 = vunpack.c.l.b16 %v34
  %v207 = vunpack.c.l.b16 %v35
  %v208 = vunpack.c.l.b16 %v36
  %v209 = vunpack.c.l.b16 %v37
  %v210 = vunpack.c.l.b16 %v38
  %v211 = vunpack.c.l.b16 %v39
  %v212 = vunpack.c.l.b16 %v40
  %v213 = vunpack.c.l.b16 %v41
  %v214 = vunpack.c.l.b16 %v42
  %v215 = vunpack.c.l.b16 %v43
  %v216 = vunpack.c.l.b16 %v44
  %v217 = vunpack.c.l.b16 %v45
  %v218 = vunpack.c.l.b16 %v46
  %v219 = vunpack.c.l.b16 %v47
  %v220 = vunpack.c.l.b16 %v48
  %v221 = vunpack.c.l.b16 %v49
  %v222 = vunpack.c.l.b16 %v50
  %v223 = vunpack.c.l.b16 %v51
  %v224 = vunpack.c.l.b16 %v52
  %v225 = vunpack.c.l.b16 %v53
  %v226 = vunpack.c.l.b16 %v54
  %v227 = vunpack.c.l.b16 %v55
  %v228 = vunpack.c.l.b16 %v56
  %v229 = vunpack.c.l.b16 %v57
  %v230 = vunpack.c.l.b16 %v58
  %v231 = vunpack.c.l.b16 %v59
  %v232 = vunpack.c.l.b16 %v60
  %v233 = vunpack.c.l.b16 %v61
  %v234 = vunpack.c.l.b16 %v62
  %v235 = vunpack.c.l.b16 %v63
  %v236 = vunpack.c.l.b16 %v64
  %v237 = vunpack.c.l.b16 %v65
  %v238 = vunpack.c.l.b16 %v66
  %v239 = vunpack.c.l.b16 %v67
  %v240 = vunpack.c.l.b16 %v68
  %v241 = vunpack.c.l.b16 %v69
  %v242 = vunpack.c.l.b16 %v70
  %v243 = vunpack.c.l.b16 %v71
  %v244 = vunpack.c.l.b16 %v72
  %v245 = vunpack.c.l.b16 %v73
  %v246 = vunpack.c.l.b16 %v74
  %v247 = vunpack.c.l.b16 %v75
  %v248 = vunpack.c.l.b16 %v76
  %v249 = vunpack.c.l.b16 %v77
  %v250 = vunpack.c.l.b16 %v78
  %v251 = vunpack.c.l.b16 %v79
  %v252 = vunpack.c.l.b16 %v80
  %v253 = vunpack.c.l.b16 %v81
  %v254 = vunpack.c.l.b16 %v82
  %v255 = vunpack.c.l.b16 %v83
  %v256 = vunpack.c.l.b16 %v84
  %v257 = vunpack.c.l.b16 %v85
  %v258 = vunpack.c.l.b16 %v86
  %v259 = vunpack.c.l.b16 %v87
  %v260 = vunpack.c.l.b16 %v88
  %v261 = vunpack.c.l.b16 %v89
  %v262 = vunpack.c.l.b16 %v90
  %v263 = vunpack.c.l.b16 %v91
  %v264 = vpack.c.b16 %v191, %v190
  %v265 = vpack.c.b16 %v193, %v192
  %v266 = vpack.c.b16 %v195, %v194
  %v267 = vpack.c.b16 %v197, %v196
  %v268 = vpack.c.b16 %v199, %v198
  %v269 = vpack.c.b16 %v201, %v200
  %v270 = vpack.c.b16 %v203, %v202
  %v271 = vpack.c.b16 %v205, %v204
  %v272 = vpack.c.b16 %v207, %v206
  %v273 = vpack.c.b16 %v209, %v208
  %v274 = vpack.c.b16 %v211, %v210
  %v275 = vpack.c.b16 %v213, %v212
  %v276 = vpack.c.b16 %v215, %v214
  %v277 = vpack.c.b16 %v217, %v216
  %v278 = vpack.c.b16 %v219, %v218
  %v279 = vpack.c.b16 %v221, %v220
  %v280 = vpack.c.b16 %v223, %v222
  %v281 = vpack.c.b16 %v225, %v224
  %v282 = vpack.c.b16 %v227, %v226
  %v283 = vpack.c.b16 %v229, %v228
  %v284 = vpack.c.b16 %v231, %v230
  %v285 = vpack.c.b16 %v233, %v232
  %v286 = vpack.c.b16 %v235, %v234
  %v287 = vpack.c.b16 %v237, %v236
  %v288 = vpack.c.b16 %v239, %v238
  %v289 = vpack.c.b16 %v241, %v240
  %v290 = vpack.c.b16 %v243, %v242
  %v291 = vpack.c.b16 %v245, %v244
  %v292 = vpack.c.b16 %v247, %v246
  %v293 = vpack.c.b16 %v249, %v248
  %v294 = vpack.c.b16 %v251, %v250
  %v295 = vpack.c.b16 %v253, %v252
  %v296 = vpack.c.b16 %v255, %v254
  %v297 = vpack.c.b16 %v257, %v256
  %v298 = vpack.c.b16 %v259, %v258
  %v299 = vpack.c.b16 %v261, %v260
  %v300 = vpack.c.b16 %v263, %v262
  %vm337 = vcmask 621568
  %v339 = vsel %vm337, %v111, 0
  %vm341 = vcmask 1045504
  %v343 = vsel %vm341, %v300, 0
  %345 = vmatprep.subr.bf16.mxu0 0
  %346 = vmatpush1.bf16.msra.mxu0 %v271
  %347 = vmatprep.subr.bf16.mxu0 0
  %348 = vmatpush1.bf16.msra.mxu0 %v270
  %349 = vmatprep.subr.bf16.mxu0 0
  %350 = vmatpush1.bf16.msra.mxu0 %v269
  %351 = vmatprep.subr.bf16.mxu0 0
  %352 = vmatpush1.bf16.msra.mxu0 %v268
  %353 = vmatprep.subr.bf16.mxu0 0
  %354 = vmatpush1.bf16.msra.mxu0 %v267
  %355 = vmatprep.subr.bf16.mxu0 0
  %356 = vmatpush1.bf16.msra.mxu0 %v266
  %357 = vmatprep.subr.bf16.mxu0 0
  %358 = vmatpush1.bf16.msra.mxu0 %v265
  %359 = vmatprep.subr.bf16.mxu0 0
  %360 = vmatpush1.bf16.msra.mxu0 %v264
  %361 = vmatprep.subr.bf16.mxu0 0
  %362 = vmatpush2.bf16.msra.mxu0 %v279
  %363 = vmatprep.subr.bf16.mxu0 0
  %364 = vmatpush2.bf16.msra.mxu0 %v278
  %365 = vmatprep.subr.bf16.mxu0 0
  %366 = vmatpush2.bf16.msra.mxu0 %v277
  %367 = vmatprep.subr.bf16.mxu0 0
  %368 = vmatpush2.bf16.msra.mxu0 %v276
  %369 = vmatprep.subr.bf16.mxu0 0
  %370 = vmatpush2.bf16.msra.mxu0 %v275
  %371 = vmatprep.subr.bf16.mxu0 0
  %372 = vmatpush2.bf16.msra.mxu0 %v274
  %373 = vmatprep.subr.bf16.mxu0 0
  %374 = vmatpush2.bf16.msra.mxu0 %v273
  %375 = vmatprep.subr.bf16.mxu0 0
  %376 = vmatpush2.bf16.msra.mxu0 %v272
  %377 = vmatprep.mubr.bf16.mxu0 %v108
  %378 = vmatmul.mubr.bf16.gmra.mxu0 %v107
  %v379 = vpop.f32.mrf.mxu0
  %v380 = vadd.f32 %v97, %v379
  %v381 = vpop.f32.mrf.mxu0
  %v382 = vpop.f32.mrf.mxu0
  %v383 = vpop.f32.mrf.mxu0
  %384 = vdwg.mxu0
  %385 = vmatprep.subr.bf16.mxu0 0
  %386 = vmatpush1.bf16.msra.mxu0 %v287
  %387 = vmatprep.subr.bf16.mxu0 0
  %388 = vmatpush1.bf16.msra.mxu0 %v286
  %389 = vmatprep.subr.bf16.mxu0 0
  %390 = vmatpush1.bf16.msra.mxu0 %v285
  %391 = vmatprep.subr.bf16.mxu0 0
  %392 = vmatpush1.bf16.msra.mxu0 %v284
  %393 = vmatprep.subr.bf16.mxu0 0
  %394 = vmatpush1.bf16.msra.mxu0 %v283
  %395 = vmatprep.subr.bf16.mxu0 0
  %396 = vmatpush1.bf16.msra.mxu0 %v282
  %397 = vmatprep.subr.bf16.mxu0 0
  %398 = vmatpush1.bf16.msra.mxu0 %v281
  %399 = vmatprep.subr.bf16.mxu0 0
  %400 = vmatpush1.bf16.msra.mxu0 %v280
  %401 = vmatprep.subr.bf16.mxu0 0
  %402 = vmatpush2.bf16.msra.mxu0 %v295
  %403 = vmatprep.subr.bf16.mxu0 0
  %404 = vmatpush2.bf16.msra.mxu0 %v294
  %405 = vmatprep.subr.bf16.mxu0 0
  %406 = vmatpush2.bf16.msra.mxu0 %v293
  %407 = vmatprep.subr.bf16.mxu0 0
  %408 = vmatpush2.bf16.msra.mxu0 %v292
  %409 = vmatprep.subr.bf16.mxu0 0
  %410 = vmatpush2.bf16.msra.mxu0 %v291
  %411 = vmatprep.subr.bf16.mxu0 0
  %412 = vmatpush2.bf16.msra.mxu0 %v290
  %413 = vmatprep.subr.bf16.mxu0 0
  %414 = vmatpush2.bf16.msra.mxu0 %v289
  %415 = vmatprep.subr.bf16.mxu0 0
  %416 = vmatpush2.bf16.msra.mxu0 %v288
  %417 = vmatprep.mubr.bf16.mxu0 %v110
  %418 = vmatmul.mubr.bf16.gmra.mxu0 %v109
  %v419 = vpop.f32.mrf.mxu0
  %v420 = vadd.f32 %v380, %v419
  %v421 = vpop.f32.mrf.mxu0
  %v422 = vpop.f32.mrf.mxu0
  %v423 = vpop.f32.mrf.mxu0
  %424 = vdwg.mxu0
  %425 = vmatprep.subr.bf16.mxu0 0
  %426 = vmatpush1.bf16.msra.mxu0 0
  %427 = vmatprep.subr.bf16.mxu0 0
  %428 = vmatpush1.bf16.msra.mxu0 0
  %429 = vmatprep.subr.bf16.mxu0 0
  %430 = vmatpush1.bf16.msra.mxu0 0
  %431 = vmatprep.subr.bf16.mxu0 0
  %432 = vmatpush1.bf16.msra.mxu0 %v343
  %433 = vmatprep.subr.bf16.mxu0 0
  %434 = vmatpush1.bf16.msra.mxu0 %v299
  %435 = vmatprep.subr.bf16.mxu0 0
  %436 = vmatpush1.bf16.msra.mxu0 %v298
  %437 = vmatprep.subr.bf16.mxu0 0
  %438 = vmatpush1.bf16.msra.mxu0 %v297
  %439 = vmatprep.subr.bf16.mxu0 0
  %440 = vmatpush1.bf16.msra.mxu0 %v296
  %441 = vmatprep.subr.bf16.mxu0 0
  %442 = vmatpush2.bf16.msra.mxu0 0
  %443 = vmatprep.subr.bf16.mxu0 0
  %444 = vmatpush2.bf16.msra.mxu0 0
  %445 = vmatprep.subr.bf16.mxu0 0
  %446 = vmatpush2.bf16.msra.mxu0 0
  %447 = vmatprep.subr.bf16.mxu0 0
  %448 = vmatpush2.bf16.msra.mxu0 0
  %449 = vmatprep.subr.bf16.mxu0 0
  %450 = vmatpush2.bf16.msra.mxu0 0
  %451 = vmatprep.subr.bf16.mxu0 0
  %452 = vmatpush2.bf16.msra.mxu0 0
  %453 = vmatprep.subr.bf16.mxu0 0
  %454 = vmatpush2.bf16.msra.mxu0 0
  %455 = vmatprep.subr.bf16.mxu0 0
  %456 = vmatpush2.bf16.msra.mxu0 0
  %457 = vmatprep.mubr.bf16.mxu0 0
  %458 = vmatmul.mubr.bf16.gmra.mxu0 %v339
  %v459 = vpop.f32.mrf.mxu0
  %v460 = vadd.f32 %v420, %v459
  %v461 = vpop.f32.mrf.mxu0
  %v462 = vpop.f32.mrf.mxu0
  %v463 = vpop.f32.mrf.mxu0
  %464 = vdwg.mxu0
  %465 = vst [vmem:[%s3] sm:$0xff] %v460
  // Predicated region
  $region14: #{sam2seg_forward.2} parent=0 // pred_check
    _
  $region15: #{sam2seg_forward.2} parent=0 // pred_check_branch
    %467 = sbr.rel (0) target = $region17
  $region16: #{sam2seg_forward.2} parent=0 // pred_region
    _
  $region17: #{sam2seg_forward.2} parent=0 // pred_fallthru
    _
  // Predicated region
  $region18: #{sam2seg_forward.2} parent=0 // pred_check
    _
  $region19: #{sam2seg_forward.2} parent=0 // pred_check_branch
    %469 = sbr.rel (0) target = $region21
  $region20: #{sam2seg_forward.2} parent=0 // pred_region
    _
  $region21: #{sam2seg_forward.2} parent=0 // pred_fallthru
    _

// kernel: sam2seg_forward.3
$region0: #{sam2seg_forward.3}
  #allocation0 [shape = 'u32[]', space=smem, size = 0x4, offset = 0x4, fixed_abs, tag = 'smem constant byte address 0x4 - core index']
  #allocation1 [shape = 'u32[144,128]{1,0:T(1,128)}', space=vmem, size = 0x12000, scoped, tag = 'internal scratch']
  %s0 = inlined_call_operand.vmem [shape: bf16[2,32,128], index: 0, kind: input, shape index: {}]
  %s1 = inlined_call_operand.vmem [shape: bf16[16,288], index: 1, kind: input, shape index: {}]
  %s2 = inlined_call_operand.vmem [shape: f32[16,1], index: 2, kind: input, shape index: {}]
  %s3 = inlined_call_operand.vmem [shape: f32[2,16,80], index: 3, kind: output, shape index: {}]
  %s4 = sld [smem:[#allocation0]]
  $region45: #{sam2seg_forward.3} parent=0
    _
  %s6 = ssub.s32 1, %s4
  %s7 = scalar_select 0, %s6, %s4
  loop: start=0, step=1, limit=4
  $region2: #{sam2seg_forward.3} parent=0 // loop_pre_header
    _
  $region3: #{sam2seg_forward.3} parent=0 // loop_header
    %s9 = sphi 0, %s13
    %p10 = scmp.ge.s32.totalorder %s9, 4
    %s19 = sphi 0, %s21
    %s22 = sphi 0, %s19
    %s23 = sphi 0, %s22
    %s39 = sphi 0, %s23
    %s43 = sphi 0, %s43
    %s45 = sphi 0, %s43
    %s46 = sphi 0, %s45
    %s60 = sphi 0, %s46
    %s64 = sphi 0, %s64
    %s66 = sphi 0, %s64
    %s67 = sphi 0, %s66
    %s81 = sphi 0, %s67
    %s87 = sphi 0, %s89
    %s90 = sphi 0, %s87
    %s91 = sphi 0, %s90
    %s107 = sphi 0, %s91
  $region4: #{sam2seg_forward.3} parent=0 // loop_header_branch
    %12 = sbr.rel (%p10) target = $region8
  $region5: #{sam2seg_forward.3} parent=0 // loop_body
    %s14 = ssub.s32 %s9, 1
    %s15 = ssub.s32 %s9, 2
    %s16 = sadd.s32 %s9, 1
    %s17 = ssub.s32 %s9, %s16
    %p18 = scmp.eq.s32.totalorder %s17, 0
    %s20 = sadd.s32 %s19, 1
    %s21 = scalar_select %p18, %s19, %s20
    %p24 = pneg %p18
    %p25 = scmp.eq.s32.totalorder %s9, 1
    %p26 = por %p24, %p25
    %p27 = scmp.ne.s32.totalorder %s19, %s22
    %p28 = scmp.eq.s32.totalorder %s9, 0
    %p29 = por %p27, %p28
    %p30 = scmp.ne.s32.totalorder %s19, %s22
    %p31 = scmp.eq.s32.totalorder %s14, 1
    %p32 = por %p30, %p31
    %p33 = scmp.ne.s32.totalorder %s22, %s23
    %p34 = scmp.eq.s32.totalorder %s14, 0
    %p35 = por %p33, %p34
    %p36 = scmp.ne.s32.totalorder %s22, %s23
    %p37 = scmp.eq.s32.totalorder %s15, 1
    %p38 = por %p36, %p37
    %p40 = scmp.ne.s32.totalorder %s23, %s39
    %p41 = scmp.eq.s32.totalorder %s15, 0
    %p42 = por %p40, %p41
    %s44 = sadd.s32 %s43, 1
    %p47 = scmp.eq.s32.totalorder %s9, 1
    %p48 = scmp.ne.s32.totalorder %s43, %s45
    %p49 = scmp.eq.s32.totalorder %s9, 0
    %p50 = por %p48, %p49
    %p51 = scmp.ne.s32.totalorder %s43, %s45
    %p52 = scmp.eq.s32.totalorder %s14, 1
    %p53 = por %p51, %p52
    %p54 = scmp.ne.s32.totalorder %s45, %s46
    %p55 = scmp.eq.s32.totalorder %s14, 0
    %p56 = por %p54, %p55
    %p57 = scmp.ne.s32.totalorder %s45, %s46
    %p58 = scmp.eq.s32.totalorder %s15, 1
    %p59 = por %p57, %p58
    %p61 = scmp.ne.s32.totalorder %s46, %s60
    %p62 = scmp.eq.s32.totalorder %s15, 0
    %p63 = por %p61, %p62
    %s65 = sadd.s32 %s64, 1
    %p68 = scmp.eq.s32.totalorder %s9, 1
    %p69 = scmp.ne.s32.totalorder %s64, %s66
    %p70 = scmp.eq.s32.totalorder %s9, 0
    %p71 = por %p69, %p70
    %p72 = scmp.ne.s32.totalorder %s64, %s66
    %p73 = scmp.eq.s32.totalorder %s14, 1
    %p74 = por %p72, %p73
    %p75 = scmp.ne.s32.totalorder %s66, %s67
    %p76 = scmp.eq.s32.totalorder %s14, 0
    %p77 = por %p75, %p76
    %p78 = scmp.ne.s32.totalorder %s66, %s67
    %p79 = scmp.eq.s32.totalorder %s15, 1
    %p80 = por %p78, %p79
    %p82 = scmp.ne.s32.totalorder %s67, %s81
    %p83 = scmp.eq.s32.totalorder %s15, 0
    %p84 = por %p82, %p83
    %s85 = ssub.s32 %s9, %s16
    %p86 = scmp.eq.s32.totalorder %s85, 0
    %s88 = sadd.s32 %s87, 1
    %s89 = scalar_select %p86, %s87, %s88
    %p92 = pneg %p86
    %p93 = scmp.eq.s32.totalorder %s9, 1
    %p94 = por %p92, %p93
    %p95 = scmp.ne.s32.totalorder %s87, %s90
    %p96 = scmp.eq.s32.totalorder %s9, 0
    %p97 = por %p95, %p96
    %p98 = scmp.ne.s32.totalorder %s87, %s90
    %p99 = scmp.eq.s32.totalorder %s14, 1
    %p100 = por %p98, %p99
    %p101 = scmp.ne.s32.totalorder %s90, %s91
    %p102 = scmp.eq.s32.totalorder %s14, 0
    %p103 = por %p101, %p102
    %p104 = scmp.ne.s32.totalorder %s90, %s91
    %p105 = scmp.eq.s32.totalorder %s15, 1
    %p106 = por %p104, %p105
    %p108 = scmp.ne.s32.totalorder %s91, %s107
    %p109 = scmp.eq.s32.totalorder %s15, 0
    %p110 = por %p108, %p109
    %p111 = scmp.le.s32.totalorder 1, %s9
    %p112 = scmp.lt.s32.totalorder %s9, 3
    %p113 = pnand %p111, %p112
    %p114 = pneg %p113
    // Predicated region
    $region9: #{sam2seg_forward.3} parent=5 // pred_check
      _
    $region10: #{sam2seg_forward.3} parent=5 // pred_check_branch
      %116 = sbr.rel (%p113) target = $region12
    $region11: #{sam2seg_forward.3} parent=5 // pred_region
      %s117 = ssub.s32 %s9, 1
      // Predicated region
      $region13: #{sam2seg_forward.3} parent=11 // pred_check
        %p118 = pneg %p56
      $region14: #{sam2seg_forward.3} parent=11 // pred_check_branch
        %120 = sbr.rel (%p118) target = $region16
      $region15: #{sam2seg_forward.3} parent=11 // pred_region
        _
      $region16: #{sam2seg_forward.3} parent=11 // pred_fallthru
        _
      // Predicated region
      $region17: #{sam2seg_forward.3} parent=11 // pred_check
        %p121 = pneg %p77
      $region18: #{sam2seg_forward.3} parent=11 // pred_check_branch
        %123 = sbr.rel (%p121) target = $region20
      $region19: #{sam2seg_forward.3} parent=11 // pred_region
        _
      $region20: #{sam2seg_forward.3} parent=11 // pred_fallthru
        _
    $region12: #{sam2seg_forward.3} parent=5 // pred_fallthru
      _
    %p124 = scmp.lt.s32.totalorder %s9, 2
    // Predicated region
    $region21: #{sam2seg_forward.3} parent=5 // pred_check
      %p125 = pneg %p124
    $region22: #{sam2seg_forward.3} parent=5 // pred_check_branch
      %127 = sbr.rel (%p125) target = $region24
    $region23: #{sam2seg_forward.3} parent=5 // pred_region
      // Predicated region
      $region25: #{sam2seg_forward.3} parent=23 // pred_check
        %p128 = pneg %p29
      $region26: #{sam2seg_forward.3} parent=23 // pred_check_branch
        %130 = sbr.rel (%p128) target = $region28
      $region27: #{sam2seg_forward.3} parent=23 // pred_region
        %p131 = scmp.lt.s32.totalorder %s9, 1
        %s132 = scalar_select %p131, %s9, 1
        %s133 = smul.addr %s132, 4
        %s134 = smul.addr %s133, 4
        %s135 = scalar_lea.vmem %s0, %s134
      $region28: #{sam2seg_forward.3} parent=23 // pred_fallthru
        _
    $region24: #{sam2seg_forward.3} parent=5 // pred_fallthru
      _
    %p136 = scmp.le.s32.totalorder 1, %s9
    %p137 = scmp.lt.s32.totalorder %s9, 3
    %p138 = pnand %p136, %p137
    %p139 = pneg %p138
    // Predicated region
    $region29: #{sam2seg_forward.3} parent=5 // pred_check
      _
    $region30: #{sam2seg_forward.3} parent=5 // pred_check_branch
      %141 = sbr.rel (%p138) target = $region32
    $region31: #{sam2seg_forward.3} parent=5 // pred_region
      %s142 = ssub.s32 %s9, 1
      %p143 = scmp.lt.s32.totalorder %s14, 1
      %s144 = scalar_select %p143, %s14, 1
      %s145 = smul.addr %s144, 4
      %s146 = smul.addr %s145, 4
      %s147 = scalar_lea.vmem %s0, %s146
      %p148 = pneg %p35
      %p149 = pneg %p32
      %p150 = pneg %p56
      %p151 = pneg %p53
      %p152 = pneg %p77
      %p153 = pneg %p74
      %p154 = pneg %p103
      %p155 = pneg %p100
      %p156 = scmp.lt.s32.totalorder %s14, 1
      %s157 = scalar_select %p156, %s14, 1
      %s158 = smul.addr %s157, 2
      %s159 = smul.addr %s158, 8
      %s160 = scalar_lea.vmem %s3, %s159
      %p161 = scmp.lt.s32.totalorder %s14, 1
      %s162 = scalar_select %p161, %s14, 1
      %s163 = smul.addr %s162, 4
      %s164 = smul.addr %s163, 4
      %s165 = scalar_lea.vmem %s0, %s164
      %p166 = scmp.lt.s32.totalorder %s14, 1
      %s167 = scalar_select %p166, %s14, 1
      %s168 = smul.addr %s167, 2
      %s169 = smul.addr %s168, 8
      %s170 = scalar_lea.vmem %s3, %s169
      %v172 = vld [vmem:[%s165] sm:$0xf]
      %v173 = vld [vmem:[%s165 + $0x4] sm:$0xf]
      %v174 = vld [vmem:[%s165 + $0x8] sm:$0xf]
      %v175 = vld [vmem:[%s165 + $0xc] sm:$0xf]
      %v180 = vunpack.c.l.b16 %v172
      %v181 = vunpack.c.l.b16 %v173
      %v182 = vunpack.c.l.b16 %v174
      %v183 = vunpack.c.l.b16 %v175
      %v184 = vpack.c.b16 %v181, %v180
      %v185 = vpack.c.b16 %v183, %v182
      %188 = vrot.lane.b32.xlu0 %v184, 127
      %v189 = vpop.permute.xlu0 %188
      %190 = vrot.lane.b32.xlu0 %v185, 127
      %v191 = vpop.permute.xlu0 %190
      %194 = vrot.lane.b32.xlu0 %v184, 126
      %v195 = vpop.permute.xlu0 %194
      %196 = vrot.lane.b32.xlu0 %v185, 126
      %v197 = vpop.permute.xlu0 %196
      %200 = vrot.lane.b32.xlu0 %v184, 118
      %v201 = vpop.permute.xlu0 %200
      %202 = vrot.lane.b32.xlu0 %v185, 118
      %v203 = vpop.permute.xlu0 %202
      %206 = vrot.lane.b32.xlu0 %v184, 117
      %v207 = vpop.permute.xlu0 %206
      %208 = vrot.lane.b32.xlu0 %v185, 117
      %v209 = vpop.permute.xlu0 %208
      %212 = vrot.lane.b32.xlu0 %v184, 116
      %v213 = vpop.permute.xlu0 %212
      %214 = vrot.lane.b32.xlu0 %v185, 116
      %v215 = vpop.permute.xlu0 %214
      %218 = vrot.lane.b32.xlu0 %v184, 108
      %v219 = vpop.permute.xlu0 %218
      %220 = vrot.lane.b32.xlu0 %v185, 108
      %v221 = vpop.permute.xlu0 %220
      %224 = vrot.lane.b32.xlu0 %v184, 107
      %v225 = vpop.permute.xlu0 %224
      %226 = vrot.lane.b32.xlu0 %v185, 107
      %v227 = vpop.permute.xlu0 %226
      %230 = vrot.lane.b32.xlu0 %v184, 106
      %v231 = vpop.permute.xlu0 %230
      %232 = vrot.lane.b32.xlu0 %v185, 106
      %v233 = vpop.permute.xlu0 %232
      %v236 = vld [vmem:[%s1] sm:$0xff]
      %v237 = vld [vmem:[%s1 + $0x8] sm:$0xf]
      %v238 = vld [vmem:[%s1 + $0xc] sm:$0xff]
      %v239 = vld [vmem:[%s1 + $0x14] sm:$0xf]
      %v240 = vld [vmem:[%s2] sm:$0xff]
      %v241 = vld [vmem:[%s2 + $0x8] sm:$0xff]
      %243 = vset.pattern.permute.xlu0 0
      %244 = vperm.xlu0 %243, %v240
      %v245 = vpop.permute.xlu0 %244
      %248 = vset.pattern.permute.xlu0 0
      %249 = vperm.xlu0 %248, %v241
      %v250 = vpop.permute.xlu0 %249
      %v256 = vunpack.c.l.b16 %v236
      %v257 = vunpack.c.h.b16 %v236
      %v258 = vunpack.c.l.b16 %v237
      %v259 = vunpack.c.l.b16 %v238
      %v260 = vunpack.c.h.b16 %v238
      %v261 = vunpack.c.l.b16 %v239
      %v262 = vpack.c.b16 %v259, %v256
      %v263 = vpack.c.b16 %v260, %v257
      %v264 = vpack.c.b16 %v261, %v258
      %vm267 = vcmask 261120
      %v269 = vsel %vm267, %v264, 0
      %271 = vmatprep.subr.bf16.mxu0 0
      %272 = vmatpush1.bf16.msra.mxu0 %v203
      %273 = vmatprep.subr.bf16.mxu0 0
      %274 = vmatpush1.bf16.msra.mxu0 %v201
      %275 = vmatprep.subr.bf16.mxu0 0
      %276 = vmatpush1.bf16.msra.mxu0 %v197
      %277 = vmatprep.subr.bf16.mxu0 0
      %278 = vmatpush1.bf16.msra.mxu0 %v195
      %279 = vmatprep.subr.bf16.mxu0 0
      %280 = vmatpush1.bf16.msra.mxu0 %v191
      %281 = vmatprep.subr.bf16.mxu0 0
      %282 = vmatpush1.bf16.msra.mxu0 %v189
      %283 = vmatprep.subr.bf16.mxu0 0
      %284 = vmatpush1.bf16.msra.mxu0 %v185
      %285 = vmatprep.subr.bf16.mxu0 0
      %286 = vmatpush1.bf16.msra.mxu0 %v184
      %287 = vmatprep.subr.bf16.mxu0 0
      %288 = vmatpush2.bf16.msra.mxu0 %v227
      %289 = vmatprep.subr.bf16.mxu0 0
      %290 = vmatpush2.bf16.msra.mxu0 %v225
      %291 = vmatprep.subr.bf16.mxu0 0
      %292 = vmatpush2.bf16.msra.mxu0 %v221
      %293 = vmatprep.subr.bf16.mxu0 0
      %294 = vmatpush2.bf16.msra.mxu0 %v219
      %295 = vmatprep.subr.bf16.mxu0 0
      %296 = vmatpush2.bf16.msra.mxu0 %v215
      %297 = vmatprep.subr.bf16.mxu0 0
      %298 = vmatpush2.bf16.msra.mxu0 %v213
      %299 = vmatprep.subr.bf16.mxu0 0
      %300 = vmatpush2.bf16.msra.mxu0 %v209
      %301 = vmatprep.subr.bf16.mxu0 0
      %302 = vmatpush2.bf16.msra.mxu0 %v207
      %303 = vmatprep.mubr.bf16.mxu0 %v263
      %304 = vmatmul.mubr.bf16.gmra.mxu0 %v262
      %v305 = vpop.f32.mrf.mxu0
      %v306 = vadd.f32 %v245, %v305
      %v307 = vpop.f32.mrf.mxu0
      %v308 = vpop.f32.mrf.mxu0
      %v309 = vadd.f32 %v250, %v308
      %v310 = vpop.f32.mrf.mxu0
      %311 = vdwg.mxu0
      %312 = vmatprep.subr.bf16.mxu0 0
      %313 = vmatpush1.bf16.msra.mxu0 0
      %314 = vmatprep.subr.bf16.mxu0 0
      %315 = vmatpush1.bf16.msra.mxu0 0
      %316 = vmatprep.subr.bf16.mxu0 0
      %317 = vmatpush1.bf16.msra.mxu0 0
      %318 = vmatprep.subr.bf16.mxu0 0
      %319 = vmatpush1.bf16.msra.mxu0 0
      %320 = vmatprep.subr.bf16.mxu0 0
      %321 = vmatpush1.bf16.msra.mxu0 0
      %322 = vmatprep.subr.bf16.mxu0 0
      %323 = vmatpush1.bf16.msra.mxu0 0
      %324 = vmatprep.subr.bf16.mxu0 0
      %325 = vmatpush1.bf16.msra.mxu0 %v233
      %326 = vmatprep.subr.bf16.mxu0 0
      %327 = vmatpush1.bf16.msra.mxu0 %v231
      %328 = vmatprep.subr.bf16.mxu0 0
      %329 = vmatpush2.bf16.msra.mxu0 0
      %330 = vmatprep.subr.bf16.mxu0 0
      %331 = vmatpush2.bf16.msra.mxu0 0
      %332 = vmatprep.subr.bf16.mxu0 0
      %333 = vmatpush2.bf16.msra.mxu0 0
      %334 = vmatprep.subr.bf16.mxu0 0
      %335 = vmatpush2.bf16.msra.mxu0 0
      %336 = vmatprep.subr.bf16.mxu0 0
      %337 = vmatpush2.bf16.msra.mxu0 0
      %338 = vmatprep.subr.bf16.mxu0 0
      %339 = vmatpush2.bf16.msra.mxu0 0
      %340 = vmatprep.subr.bf16.mxu0 0
      %341 = vmatpush2.bf16.msra.mxu0 0
      %342 = vmatprep.subr.bf16.mxu0 0
      %343 = vmatpush2.bf16.msra.mxu0 0
      %344 = vmatprep.mubr.bf16.mxu0 0
      %345 = vmatmul.mubr.bf16.gmra.mxu0 %v269
      %v346 = vpop.f32.mrf.mxu0
      %v347 = vadd.f32 %v306, %v346
      %v348 = vpop.f32.mrf.mxu0
      %v349 = vpop.f32.mrf.mxu0
      %v350 = vadd.f32 %v309, %v349
      %v351 = vpop.f32.mrf.mxu0
      %352 = vdwg.mxu0
      %vm353 = vcmask 654336
      %354 = vst.msk [vmem:[%s170] sm:$0xff] %vm353, %v347
      %355 = vst.msk [vmem:[%s170 + $0x8] sm:$0xff] %vm353, %v350
      %p356 = scmp.lt.s32.totalorder %s14, 1
      %s357 = scalar_select %p356, %s14, 1
      %s358 = smul.addr %s357, 2
      %s359 = smul.addr %s358, 8
      %s360 = scalar_lea.vmem %s3, %s359
      // Predicated region
      $region33: #{sam2seg_forward.3} parent=31 // pred_check
        %p361 = pneg %p100
      $region34: #{sam2seg_forward.3} parent=31 // pred_check_branch
        %363 = sbr.rel (%p361) target = $region36
      $region35: #{sam2seg_forward.3} parent=31 // pred_region
        _
      $region36: #{sam2seg_forward.3} parent=31 // pred_fallthru
        _
    $region32: #{sam2seg_forward.3} parent=5 // pred_fallthru
      _
    %p364 = scmp.le.s32.totalorder 2, %s9
    // Predicated region
    $region37: #{sam2seg_forward.3} parent=5 // pred_check
      %p365 = pneg %p364
    $region38: #{sam2seg_forward.3} parent=5 // pred_check_branch
      %367 = sbr.rel (%p365) target = $region40
    $region39: #{sam2seg_forward.3} parent=5 // pred_region
      %s368 = ssub.s32 %s9, 2
      // Predicated region
      $region41: #{sam2seg_forward.3} parent=39 // pred_check
        %p369 = pneg %p106
      $region42: #{sam2seg_forward.3} parent=39 // pred_check_branch
        %371 = sbr.rel (%p369) target = $region44
      $region43: #{sam2seg_forward.3} parent=39 // pred_region
        %p372 = scmp.lt.s32.totalorder %s15, 1
        %s373 = scalar_select %p372, %s15, 1
        %s374 = smul.addr %s373, 2
        %s375 = smul.addr %s374, 8
        %s376 = scalar_lea.vmem %s3, %s375
      $region44: #{sam2seg_forward.3} parent=39 // pred_fallthru
        _
    $region40: #{sam2seg_forward.3} parent=5 // pred_fallthru
      _
  $region6: #{sam2seg_forward.3} parent=0 // loop_footer
    %s13 = sadd.s32 1, %s9
  $region7: #{sam2seg_forward.3} parent=0 // loop_footer_branch
    %8 = sbr.rel target = $region3
  $region8: #{sam2seg_forward.3} parent=0 // loop_exit
    _

</llo_original>
